<compile_context>
chip_gen: v5e
topology: v5e:2x2
jax: 0.10.0
libtpu: 0.0.40
codegen_flags: <defaults>
</compile_context>

<pallas_src>
import numpy as np
import jax
import jax.numpy as jnp
from jax.experimental import pallas as pl
from jax.experimental.pallas import tpu as pltpu

EPS = 1e-5


# --------------------------------------------------------------------------- #
# Kernels
# --------------------------------------------------------------------------- #
def _stats_kernel(p_ref, w_ref, sum_ref, sq_ref):
    """Pass 1: accumulate per-row sum / sum-of-squares of the conv output."""
    @pl.when(pl.program_id(0) == 0)
    def _init():
        sum_ref[...] = jnp.zeros_like(sum_ref)
        sq_ref[...] = jnp.zeros_like(sq_ref)

    # (Co4, K) x (K, tile_m) -> (Co4, tile_m); bf16 operands, f32 accumulation.
    acc = jnp.dot(w_ref[...], p_ref[...], preferred_element_type=jnp.float32)
    sum_ref[...] += jnp.sum(acc, axis=1, keepdims=True)
    sq_ref[...] += jnp.sum(acc * acc, axis=1, keepdims=True)


def _apply_kernel(p_ref, w_ref, scale_ref, shift_ref, o_ref):
    """Pass 2: conv tile -> fused BatchNorm affine -> ReLU (lane-dense store)."""
    acc = jnp.dot(w_ref[...], p_ref[...], preferred_element_type=jnp.float32)
    y = acc * scale_ref[...] + shift_ref[...]        # (Co4, 1) broadcast over lanes
    o_ref[...] = jnp.maximum(y, 0.0)


# --------------------------------------------------------------------------- #
# Wrapper
# --------------------------------------------------------------------------- #
def up_forward(x, w_t, bias, gamma, beta, stride, *, tile_m=1024):
    """x: (N, Cin, H, W) NCHW; w_t: (Cin, Cout, 3, 3) ConvTranspose2d weight.

    `bias` is accepted for interface parity but unused: the conv bias is exactly
    cancelled by the train-mode BatchNorm mean subtraction.
    """
    del bias
    N, Cin, H, W = x.shape
    Cout = w_t.shape[1]
    s = int(stride)
    assert s >= 2, "Up is an upsampling block; stride >= 2 expected"
    # TODO(synk): stride==1 (plain 3x3 conv) path not implemented.
    assert tile_m % 128 == 0, "tile_m must be lane-dense (multiple of 128)"

    K = 4 * Cin            # dense 2x2 input window, channels innermost
    Co4 = s * s * Cout     # s*s output sub-positions per input pixel
    M = N * H * W

    # ---- glue (wrapper-side layout only) ------------------------------------
    # 2x2 windows of the bottom/right zero-padded input, transposed so the pixel
    # index is the (lane-dense) minor dimension: patches_T is (K, M), bf16.
    x_pad = jnp.pad(x, ((0, 0), (0, 0), (0, 1), (0, 1)))
    cols = []
    for u in (0, 1):
        for v in (0, 1):
            blk = x_pad[:, :, u:u + H, v:v + W]                      # (N, Cin, H, W)
            cols.append(jnp.transpose(blk, (1, 0, 2, 3)).reshape(Cin, M))
    patches_T = jnp.concatenate(cols, axis=0).astype(jnp.bfloat16)   # (K, M)

    # Sub-pixel weight matrix: row (rh*s+rw)*Cout+co, col (2u+v)*Cin+ci holds
    # w_t[ci, co, rh+1-s*u, rw+1-s*v] when that kernel tap exists, else 0.
    kidx = np.arange(s)[:, None] + 1 - s * np.arange(2)[None, :]     # (s, 2)
    valid = (kidx >= 0) & (kidx <= 2)
    kclip = np.clip(kidx, 0, 2)
    w_g = w_t[:, :, kclip][:, :, :, :, kclip]                        # (Cin,Cout,s,2,s,2)
    mask = jnp.asarray(valid[:, :, None, None] & valid[None, None, :, :], w_t.dtype)
    w_g = w_g * mask[None, None]
    w_mat_T = jnp.transpose(w_g, (2, 4, 1, 3, 5, 0)).reshape(Co4, K)
    w_mat_T = w_mat_T.astype(jnp.bfloat16)                           # (Co4, K)

    # Pad M to a whole number of lane-dense tiles. Zero columns contribute 0 to
    # the BN sums (so stats stay exact) and their outputs are sliced off below.
    grid_m = pl.cdiv(M, tile_m)
    M_pad = grid_m * tile_m
    if M_pad != M:
        patches_T = jnp.pad(patches_T, ((0, 0), (0, M_pad - M)))

    p_spec = pl.BlockSpec((K, tile_m), lambda i: (0, i))      # tiled over pixels
    w_spec = pl.BlockSpec((Co4, K), lambda i: (0, 0))         # VMEM-resident
    vec_spec = pl.BlockSpec((Co4, 1), lambda i: (0, 0))       # VMEM-resident

    matmul_flops = 2 * Co4 * K * M_pad
    patch_bytes = K * M_pad * 2
    w_bytes = Co4 * K * 2

    # ---- pass 1: global BN statistics (per-row sum / sum-of-squares) --------
    sums, sqs = pl.pallas_call(
        _stats_kernel,
        out_shape=(jax.ShapeDtypeStruct((Co4, 1), jnp.float32),
                   jax.ShapeDtypeStruct((Co4, 1), jnp.float32)),
        grid=(grid_m,),
        in_specs=[p_spec, w_spec],
        out_specs=(vec_spec, vec_spec),
        compiler_params=pltpu.CompilerParams(
            dimension_semantics=("arbitrary",)),     # resident accumulator across tiles
        cost_estimate=pl.CostEstimate(
            flops=matmul_flops + 3 * Co4 * M_pad, transcendentals=0,
            bytes_accessed=patch_bytes + w_bytes + 2 * Co4 * 4),
    )(patches_T, w_mat_T)

    # Tiny epilogue: pool the s*s sub-positions per channel, fold gamma/beta/eps.
    cnt = float(M * s * s)                                # = N * OH * OW
    ch_sum = sums.reshape(s * s, Cout).sum(axis=0)
    ch_sq = sqs.reshape(s * s, Cout).sum(axis=0)
    mean = ch_sum / cnt
    var = ch_sq / cnt - mean * mean                       # biased, as PyTorch normalizes
    scale_c = gamma * jax.lax.rsqrt(var + EPS)
    shift_c = beta - mean * scale_c
    scale = jnp.tile(scale_c, s * s).reshape(Co4, 1)
    shift = jnp.tile(shift_c, s * s).reshape(Co4, 1)

    # ---- pass 2: normalize + affine + ReLU, lane-dense output ----------------
    out_t = pl.pallas_call(
        _apply_kernel,
        out_shape=jax.ShapeDtypeStruct((Co4, M_pad), jnp.float32),
        grid=(grid_m,),
        in_specs=[p_spec, w_spec, vec_spec, vec_spec],
        out_specs=pl.BlockSpec((Co4, tile_m), lambda i: (0, i)),
        compiler_params=pltpu.CompilerParams(
            dimension_semantics=("parallel",)),      # v7x: shard tiles over both TCs
        cost_estimate=pl.CostEstimate(
            flops=matmul_flops + 3 * Co4 * M_pad, transcendentals=0,
            bytes_accessed=patch_bytes + w_bytes + Co4 * M_pad * 4),
    )(patches_T, w_mat_T, scale, shift)

    # ---- glue: un-shuffle (s*s*Cout, N*H*W) -> NCHW (N, Cout, H*s, W*s) ------
    out = out_t[:, :M].reshape(s, s, Cout, N, H, W)
    out = jnp.transpose(out, (3, 2, 4, 0, 5, 1)).reshape(N, Cout, H * s, W * s)
    return out


# --------------------------------------------------------------------------- #
# NumPy reference (float64 scatter-form ConvTranspose2d + train-mode BN + ReLU)
# --------------------------------------------------------------------------- #
def np_reference(x, w_t, bias, gamma, beta, stride, k=3, pad=1):
    N, Cin, H, W = x.shape
    Cout = w_t.shape[1]
    out_pad = stride - 1
    OH = (H - 1) * stride - 2 * pad + k + out_pad
    OW = (W - 1) * stride - 2 * pad + k + out_pad
    out = np.zeros((N, Cout, OH, OW), np.float64)
    for n in range(N):
        for ci in range(Cin):
            for ih in range(H):
                for iw in range(W):
                    v = x[n, ci, ih, iw]
                    for kh in range(k):
                        oh = ih * stride - pad + kh
                        if oh < 0 or oh >= OH:
                            continue
                        for kw in range(k):
                            ow = iw * stride - pad + kw
                            if ow < 0 or ow >= OW:
                                continue
                            out[n, :, oh, ow] += v * w_t[ci, :, kh, kw]
    out += bias[None, :, None, None]
    mean = out.mean(axis=(0, 2, 3), keepdims=True)
    var = out.var(axis=(0, 2, 3), keepdims=True)   # biased, matches PyTorch normalization
    y = (out - mean) / np.sqrt(var + EPS) * gamma[None, :, None, None] + beta[None, :, None, None]
    return np.maximum(y, 0.0).astype(np.float32)


if __name__ == "__main__":
    # Up(s_in=2, s_out=1, f_in=4, f=8)  ->  stride = 2
    s_in, s_out, f_in, f = 2, 1, 4, 8
    stride = int(s_in / s_out)
    N, H, W = 2, 16, 16

    key = jax.random.PRNGKey(0)
    k1, k2, k3, k4, k5 = jax.random.split(key, 5)
    x = jax.random.normal(k1, (N, f_in, H, W), jnp.float32)
    w_t = jax.random.normal(k2, (f_in, f, 3, 3), jnp.float32) * 0.1   # ConvTranspose2d.weight
    bias = jax.random.normal(k3, (f,), jnp.float32) * 0.1             # ConvTranspose2d.bias
    gamma = jax.random.uniform(k4, (f,), jnp.float32, 0.5, 1.5)       # BN weight
    beta = jax.random.normal(k5, (f,), jnp.float32) * 0.1             # BN bias

    # tile_m=128 at this toy size exercises a 4-step grid (cross-tile BN stat
    # accumulation + the parallel apply pass); real shapes use the larger default.
    out = jax.block_until_ready(up_forward(x, w_t, bias, gamma, beta, stride, tile_m=128))

    # Structural check: reference fed the SAME bf16-rounded conv inputs (kernel
    # accumulates in f32), so any layout / weight-mapping / BN bug shows up here.
    x_b = np.asarray(x.astype(jnp.bfloat16).astype(jnp.float32), np.float64)
    w_b = np.asarray(w_t.astype(jnp.bfloat16).astype(jnp.float32), np.float64)
    ref_b = np_reference(x_b, w_b, np.asarray(bias), np.asarray(gamma),
                         np.asarray(beta), stride)
    np.testing.assert_allclose(np.asarray(out), ref_b, rtol=5e-4, atol=5e-4)

    # End-to-end check vs exact float64 ground truth; slack is the documented
    # bf16 input-quantization budget after BN normalization (unit-variance data).
    ref = np_reference(np.asarray(x, np.float64), np.asarray(w_t, np.float64),
                       np.asarray(bias), np.asarray(gamma), np.asarray(beta), stride)
    np.testing.assert_allclose(np.asarray(out), ref, rtol=3e-2, atol=3e-2)

    print("KERNEL_OK")
</pallas_src>

<mosaic_0001>
module attributes {stable_mosaic.version = 11 : i64} {
  func.func @_stats_kernel(%arg0: i32, %arg1: memref<16x128xbf16, #tpu.memory_space<vmem>>, %arg2: memref<32x16xbf16, #tpu.memory_space<vmem>>, %arg3: memref<32x1xf32, #tpu.memory_space<vmem>>, %arg4: memref<32x1xf32, #tpu.memory_space<vmem>>) attributes {dimension_semantics = [#tpu.dimension_semantics<arbitrary>], iteration_bounds = array<i64: 4>, scalar_prefetch = 0 : i64, scratch_operands = 0 : i64, tpu.core_type = #tpu.core_type<tc>, window_params = [{transform_indices = @transform_0, window_bounds = array<i64: 16, 128>}, {pipeline_mode = #tpu.pipeline_mode<synchronous>, transform_indices = @transform_1, window_bounds = array<i64: 32, 16>}, {pipeline_mode = #tpu.pipeline_mode<synchronous>, transform_indices = @transform_2, window_bounds = array<i64: 32, 1>}, {pipeline_mode = #tpu.pipeline_mode<synchronous>, transform_indices = @transform_3, window_bounds = array<i64: 32, 1>}]} {
    %c0_i32 = arith.constant 0 : i32
    %0 = arith.cmpi eq, %arg0, %c0_i32 : i32
    %1 = arith.extui %0 : i1 to i32
    %c0_i32_0 = arith.constant 0 : i32
    %2 = arith.cmpi ne, %1, %c0_i32_0 : i32
    scf.if %2 {
      %cst_14 = arith.constant 0.000000e+00 : f32
      %17 = vector.broadcast %cst_14 : f32 to vector<32x1xf32>
      %c0_15 = arith.constant 0 : index
      %c0_16 = arith.constant 0 : index
      %18 = vector.load %arg3[%c0_15, %c0_16] : memref<32x1xf32, #tpu.memory_space<vmem>>, vector<32x1xf32>
      tpu.vector_store %arg3[%c0_15, %c0_16], %17 {strides = array<i32>} : memref<32x1xf32, #tpu.memory_space<vmem>>, vector<32x1xf32>,
      %cst_17 = arith.constant 0.000000e+00 : f32
      %19 = vector.broadcast %cst_17 : f32 to vector<32x1xf32>
      %c0_18 = arith.constant 0 : index
      %c0_19 = arith.constant 0 : index
      %20 = vector.load %arg4[%c0_18, %c0_19] : memref<32x1xf32, #tpu.memory_space<vmem>>, vector<32x1xf32>
      tpu.vector_store %arg4[%c0_18, %c0_19], %19 {strides = array<i32>} : memref<32x1xf32, #tpu.memory_space<vmem>>, vector<32x1xf32>,
    } else {
    }
    %c0 = arith.constant 0 : index
    %c0_1 = arith.constant 0 : index
    %3 = vector.load %arg2[%c0, %c0_1] : memref<32x16xbf16, #tpu.memory_space<vmem>>, vector<32x16xbf16>
    %c0_2 = arith.constant 0 : index
    %c0_3 = arith.constant 0 : index
    %4 = vector.load %arg1[%c0_2, %c0_3] : memref<16x128xbf16, #tpu.memory_space<vmem>>, vector<16x128xbf16>
    %cst = arith.constant dense<0.000000e+00> : vector<32x128xf32>
    %5 = tpu.matmul %3, %4, %cst {dimension_numbers = #tpu.dot_dimension_numbers<[1], [0], [0], [1], [0, 0, 1, 1], [], []>} : vector<32x16xbf16>, vector<16x128xbf16>, vector<32x128xf32> -> vector<32x128xf32>
    %c0_4 = arith.constant 0 : index
    %c0_5 = arith.constant 0 : index
    %6 = vector.load %arg3[%c0_4, %c0_5] : memref<32x1xf32, #tpu.memory_space<vmem>>, vector<32x1xf32>
    %cst_6 = arith.constant dense<0.000000e+00> : vector<32xf32>
    %7 = vector.multi_reduction <add>, %5, %cst_6 [1] : vector<32x128xf32> to vector<32xf32>
    %8 = vector.shape_cast %7 : vector<32xf32> to vector<32x1xf32>
    %9 = arith.addf %6, %8 : vector<32x1xf32>
    %c0_7 = arith.constant 0 : index
    %c0_8 = arith.constant 0 : index
    %10 = vector.load %arg3[%c0_7, %c0_8] : memref<32x1xf32, #tpu.memory_space<vmem>>, vector<32x1xf32>
    tpu.vector_store %arg3[%c0_7, %c0_8], %9 {strides = array<i32>} : memref<32x1xf32, #tpu.memory_space<vmem>>, vector<32x1xf32>,
    %c0_9 = arith.constant 0 : index
    %c0_10 = arith.constant 0 : index
    %11 = vector.load %arg4[%c0_9, %c0_10] : memref<32x1xf32, #tpu.memory_space<vmem>>, vector<32x1xf32>
    %12 = arith.mulf %5, %5 : vector<32x128xf32>
    %cst_11 = arith.constant dense<0.000000e+00> : vector<32xf32>
    %13 = vector.multi_reduction <add>, %12, %cst_11 [1] : vector<32x128xf32> to vector<32xf32>
    %14 = vector.shape_cast %13 : vector<32xf32> to vector<32x1xf32>
    %15 = arith.addf %11, %14 : vector<32x1xf32>
    %c0_12 = arith.constant 0 : index
    %c0_13 = arith.constant 0 : index
    %16 = vector.load %arg4[%c0_12, %c0_13] : memref<32x1xf32, #tpu.memory_space<vmem>>, vector<32x1xf32>
    tpu.vector_store %arg4[%c0_12, %c0_13], %15 {strides = array<i32>} : memref<32x1xf32, #tpu.memory_space<vmem>>, vector<32x1xf32>,
    return
  }
  func.func @transform_0(%arg0: i32) -> (i32, i32) {
    %c0_i32 = arith.constant 0 : i32
    %c0_i32_0 = arith.constant 0 : i32
    return %c0_i32, %arg0 : i32, i32
  }
  func.func @transform_1(%arg0: i32) -> (i32, i32) {
    %c0_i32 = arith.constant 0 : i32
    %c0_i32_0 = arith.constant 0 : i32
    %c0_i32_1 = arith.constant 0 : i32
    return %c0_i32, %c0_i32_0 : i32, i32
  }
  func.func @transform_2(%arg0: i32) -> (i32, i32) {
    %c0_i32 = arith.constant 0 : i32
    %c0_i32_0 = arith.constant 0 : i32
    %c0_i32_1 = arith.constant 0 : i32
    return %c0_i32, %c0_i32_0 : i32, i32
  }
  func.func @transform_3(%arg0: i32) -> (i32, i32) {
    %c0_i32 = arith.constant 0 : i32
    %c0_i32_0 = arith.constant 0 : i32
    %c0_i32_1 = arith.constant 0 : i32
    return %c0_i32, %c0_i32_0 : i32, i32
  }
}

</mosaic_0001>

<llo_original>
// kernel: tpu_custom_call.1
$region0: #{tpu_custom_call.1}
  #allocation0 [shape = 'u32[]', space=smem, size = 0x4, offset = 0x4, fixed_abs, tag = 'smem constant byte address 0x4 - core index']
  #allocation1 [shape = 'u32[72,128]{1,0:T(1,128)}', space=vmem, size = 0x9000, scoped, tag = 'internal scratch']
  %s0 = inlined_call_operand.hbm [shape: bf16[16,512], index: 0, kind: input, shape index: {}]
  %s1 = inlined_call_operand.vmem [shape: bf16[32,16], index: 1, kind: input, shape index: {}]
  %s2 = inlined_call_operand.vmem [shape: f32[32,1], index: 2, kind: output, shape index: {0}]
  %s3 = inlined_call_operand.vmem [shape: f32[32,1], index: 3, kind: output, shape index: {1}]
  %4 = xla_tuple %s2, %s3
  %s5 = sld [smem:[#allocation0]]
  $region57: #{tpu_custom_call.1} parent=0
    _
  %s7 = ssub.s32 1, %s5
  %s8 = scalar_select 0, %s7, %s5
  $region1: #{tpu_custom_call.1} parent=0
    #allocation2 [shape = 'u8[8192]{0}', space=vmem, size = 0x2000, scoped, tag = 'input window, operand 0']
    #allocation3 [shape = 's32[2]{0}', space=sflag, size = 0x8, scoped, tag = 'scoped memory for tpu_custom_call.1']
    %9 = vsyncpa [#allocation3], 0
    %s10 = scalar_lea.sflag [#allocation3], 1
    %11 = vsyncpa %s10, 0
    loop: start=0, step=1, limit=6
    $region2: #{tpu_custom_call.1} parent=1 // loop_pre_header
      _
    $region3: #{tpu_custom_call.1} parent=1 // loop_header
      %s13 = sphi 0, %s17
      %p14 = scmp.ge.s32.totalorder %s13, 6
      %s23 = sphi 0, %s25
      %s26 = sphi 0, %s23
      %s27 = sphi 0, %s26
      %s43 = sphi 0, %s27
      %s47 = sphi 0, %s47
      %s49 = sphi 0, %s47
      %s50 = sphi 0, %s49
      %s64 = sphi 0, %s50
      %s68 = sphi 0, %s68
      %s70 = sphi 0, %s68
      %s71 = sphi 0, %s70
      %s85 = sphi 0, %s71
      %s89 = sphi 0, %s89
      %s91 = sphi 0, %s89
      %s92 = sphi 0, %s91
      %s106 = sphi 0, %s92
    $region4: #{tpu_custom_call.1} parent=1 // loop_header_branch
      %16 = sbr.rel (%p14) target = $region8
    $region5: #{tpu_custom_call.1} parent=1 // loop_body
      %s18 = ssub.s32 %s13, 1
      %s19 = ssub.s32 %s13, 2
      %s20 = sadd.s32 %s13, 1
      %s21 = ssub.s32 %s13, %s20
      %p22 = scmp.eq.s32.totalorder %s21, 0
      %s24 = sadd.s32 %s23, 1
      %s25 = scalar_select %p22, %s23, %s24
      %p28 = pneg %p22
      %p29 = scmp.eq.s32.totalorder %s13, 3
      %p30 = por %p28, %p29
      %p31 = scmp.ne.s32.totalorder %s23, %s26
      %p32 = scmp.eq.s32.totalorder %s13, 0
      %p33 = por %p31, %p32
      %p34 = scmp.ne.s32.totalorder %s23, %s26
      %p35 = scmp.eq.s32.totalorder %s18, 3
      %p36 = por %p34, %p35
      %p37 = scmp.ne.s32.totalorder %s26, %s27
      %p38 = scmp.eq.s32.totalorder %s18, 0
      %p39 = por %p37, %p38
      %p40 = scmp.ne.s32.totalorder %s26, %s27
      %p41 = scmp.eq.s32.totalorder %s19, 3
      %p42 = por %p40, %p41
      %p44 = scmp.ne.s32.totalorder %s27, %s43
      %p45 = scmp.eq.s32.totalorder %s19, 0
      %p46 = por %p44, %p45
      %s48 = sadd.s32 %s47, 1
      %p51 = scmp.eq.s32.totalorder %s13, 3
      %p52 = scmp.ne.s32.totalorder %s47, %s49
      %p53 = scmp.eq.s32.totalorder %s13, 0
      %p54 = por %p52, %p53
      %p55 = scmp.ne.s32.totalorder %s47, %s49
      %p56 = scmp.eq.s32.totalorder %s18, 3
      %p57 = por %p55, %p56
      %p58 = scmp.ne.s32.totalorder %s49, %s50
      %p59 = scmp.eq.s32.totalorder %s18, 0
      %p60 = por %p58, %p59
      %p61 = scmp.ne.s32.totalorder %s49, %s50
      %p62 = scmp.eq.s32.totalorder %s19, 3
      %p63 = por %p61, %p62
      %p65 = scmp.ne.s32.totalorder %s50, %s64
      %p66 = scmp.eq.s32.totalorder %s19, 0
      %p67 = por %p65, %p66
      %s69 = sadd.s32 %s68, 1
      %p72 = scmp.eq.s32.totalorder %s13, 3
      %p73 = scmp.ne.s32.totalorder %s68, %s70
      %p74 = scmp.eq.s32.totalorder %s13, 0
      %p75 = por %p73, %p74
      %p76 = scmp.ne.s32.totalorder %s68, %s70
      %p77 = scmp.eq.s32.totalorder %s18, 3
      %p78 = por %p76, %p77
      %p79 = scmp.ne.s32.totalorder %s70, %s71
      %p80 = scmp.eq.s32.totalorder %s18, 0
      %p81 = por %p79, %p80
      %p82 = scmp.ne.s32.totalorder %s70, %s71
      %p83 = scmp.eq.s32.totalorder %s19, 3
      %p84 = por %p82, %p83
      %p86 = scmp.ne.s32.totalorder %s71, %s85
      %p87 = scmp.eq.s32.totalorder %s19, 0
      %p88 = por %p86, %p87
      %s90 = sadd.s32 %s89, 1
      %p93 = scmp.eq.s32.totalorder %s13, 3
      %p94 = scmp.ne.s32.totalorder %s89, %s91
      %p95 = scmp.eq.s32.totalorder %s13, 0
      %p96 = por %p94, %p95
      %p97 = scmp.ne.s32.totalorder %s89, %s91
      %p98 = scmp.eq.s32.totalorder %s18, 3
      %p99 = por %p97, %p98
      %p100 = scmp.ne.s32.totalorder %s91, %s92
      %p101 = scmp.eq.s32.totalorder %s18, 0
      %p102 = por %p100, %p101
      %p103 = scmp.ne.s32.totalorder %s91, %s92
      %p104 = scmp.eq.s32.totalorder %s19, 3
      %p105 = por %p103, %p104
      %p107 = scmp.ne.s32.totalorder %s92, %s106
      %p108 = scmp.eq.s32.totalorder %s19, 0
      %p109 = por %p107, %p108
      %p110 = scmp.le.s32.totalorder 1, %s13
      %p111 = scmp.lt.s32.totalorder %s13, 5
      %p112 = pnand %p110, %p111
      %p113 = pneg %p112
      // Predicated region
      $region9: #{tpu_custom_call.1} parent=5 // pred_check
        _
      $region10: #{tpu_custom_call.1} parent=5 // pred_check_branch
        %115 = sbr.rel (%p112) target = $region12
      $region11: #{tpu_custom_call.1} parent=5 // pred_region
        %s116 = ssub.s32 %s13, 1
        // Predicated region
        $region13: #{tpu_custom_call.1} parent=11 // pred_check
          %p117 = pneg %p60
        $region14: #{tpu_custom_call.1} parent=11 // pred_check_branch
          %119 = sbr.rel (%p117) target = $region16
        $region15: #{tpu_custom_call.1} parent=11 // pred_region
          _
        $region16: #{tpu_custom_call.1} parent=11 // pred_fallthru
          _
      $region12: #{tpu_custom_call.1} parent=5 // pred_fallthru
        _
      %p120 = scmp.lt.s32.totalorder %s13, 4
      // Predicated region
      $region17: #{tpu_custom_call.1} parent=5 // pred_check
        %p121 = pneg %p120
      $region18: #{tpu_custom_call.1} parent=5 // pred_check_branch
        %123 = sbr.rel (%p121) target = $region20
      $region19: #{tpu_custom_call.1} parent=5 // pred_region
        // Predicated region
        $region21: #{tpu_custom_call.1} parent=19 // pred_check
          %p124 = pneg %p33
        $region22: #{tpu_custom_call.1} parent=19 // pred_check_branch
          %126 = sbr.rel (%p124) target = $region24
        $region23: #{tpu_custom_call.1} parent=19 // pred_region
          %s127 = sand.u32 %s23, 1
          %s128 = scalar_lea.sflag [#allocation3], %s127
          %s129 = sand.u32 %s23, 1
          %s130 = smul.addr %s129, 8
          %s131 = scalar_lea.vmem [#allocation2], %s130
          %133 = vsyncadd %s128, 0
          %s134 = smul.addr %s13, 4
          %s135 = scalar_lea.hbm %s0, %s134
          %s136 = sshll.u32 %s135, 4
          %s137 = int_to_ptr.hbm [resolvable:$true] %s136
          %s138 = sshll.u32 %s131, 4
          %s139 = int_to_ptr.vmem [resolvable:$true] %s138
          %144 = dma.hbm_to_vmem [thread:$0]  %s137, 128, %s139, %s128, 256, 64, 4
        $region24: #{tpu_custom_call.1} parent=19 // pred_fallthru
          _
      $region20: #{tpu_custom_call.1} parent=5 // pred_fallthru
        _
      %p145 = scmp.le.s32.totalorder 1, %s13
      %p146 = scmp.lt.s32.totalorder %s13, 5
      %p147 = pnand %p145, %p146
      %p148 = pneg %p147
      // Predicated region
      $region25: #{tpu_custom_call.1} parent=5 // pred_check
        _
      $region26: #{tpu_custom_call.1} parent=5 // pred_check_branch
        %150 = sbr.rel (%p147) target = $region28
      $region27: #{tpu_custom_call.1} parent=5 // pred_region
        %s151 = ssub.s32 %s13, 1
        %s152 = sand.u32 %s26, 1
        %s153 = scalar_lea.sflag [#allocation3], %s152
        %s154 = sand.u32 %s26, 1
        %s155 = smul.addr %s154, 8
        %s156 = scalar_lea.vmem [#allocation2], %s155
        // Predicated region
        $region29: #{tpu_custom_call.1} parent=27 // pred_check
          %p157 = pneg %p39
        $region30: #{tpu_custom_call.1} parent=27 // pred_check_branch
          %159 = sbr.rel (%p157) target = $region32
        $region31: #{tpu_custom_call.1} parent=27 // pred_region
          %161 = dma.done %s153, 128
        $region32: #{tpu_custom_call.1} parent=27 // pred_fallthru
          _
        %s162 = sand.u32 %s26, 1
        %s163 = scalar_lea.sflag [#allocation3], %s162
        %s164 = sand.u32 %s26, 1
        %s165 = smul.addr %s164, 8
        %s166 = scalar_lea.vmem [#allocation2], %s165
        %p167 = pneg %p39
        %p168 = pneg %p36
        %p169 = pneg %p60
        %p170 = pneg %p57
        %p171 = pneg %p81
        %p172 = pneg %p78
        %p173 = pneg %p102
        %p174 = pneg %p99
        %p176 = scmp.eq.s32.totalorder %s18, 0
        // Predicated region
        $region33: #{tpu_custom_call.1} parent=27 // pred_check
          %p177 = pneg %p176
        $region34: #{tpu_custom_call.1} parent=27 // pred_check_branch
          %179 = sbr.rel (%p177) target = $region36
        $region35: #{tpu_custom_call.1} parent=27 // pred_region
          %vm180 = vcmask 7168
          %181 = vst.msk [vmem:[%s2] sm:$0xff] %vm180, 0.0
          %182 = vst.msk [vmem:[%s2 + $0x8] sm:$0xff] %vm180, 0.0
          %183 = vst.msk [vmem:[%s2 + $0x10] sm:$0xff] %vm180, 0.0
          %184 = vst.msk [vmem:[%s2 + $0x18] sm:$0xff] %vm180, 0.0
          %185 = vst.msk [vmem:[%s3] sm:$0xff] %vm180, 0.0
          %186 = vst.msk [vmem:[%s3 + $0x8] sm:$0xff] %vm180, 0.0
          %187 = vst.msk [vmem:[%s3 + $0x10] sm:$0xff] %vm180, 0.0
          %188 = vst.msk [vmem:[%s3 + $0x18] sm:$0xff] %vm180, 0.0
        $region36: #{tpu_custom_call.1} parent=27 // pred_fallthru
          _
        %v189 = vld [vmem:[%s1] sm:$0xf]
        %v190 = vld [vmem:[%s1 + $0x4] sm:$0xf]
        %v191 = vld [vmem:[%s1 + $0x8] sm:$0xf]
        %v192 = vld [vmem:[%s1 + $0xc] sm:$0xf]
        %v193 = vld [vmem:[%s156] sm:$0xf]
        %v194 = vld [vmem:[%s156 + $0x4] sm:$0xf]
        %v199 = vunpack.c.l.b16 %v189
        %v200 = vunpack.c.l.b16 %v190
        %v201 = vunpack.c.l.b16 %v191
        %v202 = vunpack.c.l.b16 %v192
        %v203 = vpack.c.b16 %v200, %v199
        %v204 = vpack.c.b16 %v202, %v201
        %v207 = vunpack.c.l.b16 %v193
        %v208 = vunpack.c.l.b16 %v194
        %v209 = vpack.c.b16 %v208, %v207
        %vm211 = vcmask 130048
        %v213 = vsel %vm211, %v203, 0
        %v216 = vsel %vm211, %v204, 0
        %218 = vmatpush.bf16.msra.mxu0 0
        %219 = vmatpush.bf16.msra.mxu0 0
        %220 = vmatpush.bf16.msra.mxu0 0
        %221 = vmatpush.bf16.msra.mxu0 0
        %222 = vmatpush.bf16.msra.mxu0 0
        %223 = vmatpush.bf16.msra.mxu0 0
        %224 = vmatpush.bf16.msra.mxu0 0
        %225 = vmatpush.bf16.msra.mxu0 %v209
        %226 = vmatmul.bf16.gmra.mxu0 %v213
        %v227 = vpop.f32.mrf.mxu0
        %v228 = vadd.f32 0.0, %v227
        %v229 = vpop.f32.mrf.mxu0
        %v230 = vadd.f32 0.0, %v229
        %231 = vmatmul.bf16.gmra.mxu0 %v216
        %v232 = vpop.f32.mrf.mxu0
        %v233 = vadd.f32 0.0, %v232
        %v234 = vpop.f32.mrf.mxu0
        %v235 = vadd.f32 0.0, %v234
        %236 = vdwg.mxu0
        %v237 = vld [vmem:[%s2] sm:$0xff]
        %v238 = vld [vmem:[%s2 + $0x8] sm:$0xff]
        %v239 = vld [vmem:[%s2 + $0x10] sm:$0xff]
        %v240 = vld [vmem:[%s2 + $0x18] sm:$0xff]
        %241 = vadd.xlane.f32.xlu0 %v228
        %v242 = vpop.xlane.xlu0 %241
        %243 = vadd.xlane.f32.xlu0 %v230
        %v244 = vpop.xlane.xlu0 %243
        %245 = vadd.xlane.f32.xlu0 %v233
        %v246 = vpop.xlane.xlu0 %245
        %247 = vadd.xlane.f32.xlu0 %v235
        %v248 = vpop.xlane.xlu0 %247
        %v249 = vadd.f32 %v237, %v242
        %v250 = vadd.f32 %v238, %v244
        %v251 = vadd.f32 %v239, %v246
        %v252 = vadd.f32 %v240, %v248
        %vm253 = vcmask 7168
        %254 = vst.msk [vmem:[%s2] sm:$0xff] %vm253, %v249
        %255 = vst.msk [vmem:[%s2 + $0x8] sm:$0xff] %vm253, %v250
        %256 = vst.msk [vmem:[%s2 + $0x10] sm:$0xff] %vm253, %v251
        %257 = vst.msk [vmem:[%s2 + $0x18] sm:$0xff] %vm253, %v252
        %v258 = vld [vmem:[%s3] sm:$0xff]
        %v259 = vld [vmem:[%s3 + $0x8] sm:$0xff]
        %v260 = vld [vmem:[%s3 + $0x10] sm:$0xff]
        %v261 = vld [vmem:[%s3 + $0x18] sm:$0xff]
        %v262 = vmul.f32 %v228, %v228
        %v263 = vmul.f32 %v230, %v230
        %v264 = vmul.f32 %v233, %v233
        %v265 = vmul.f32 %v235, %v235
        %266 = vadd.xlane.f32.xlu0 %v262
        %v267 = vpop.xlane.xlu0 %266
        %268 = vadd.xlane.f32.xlu0 %v263
        %v269 = vpop.xlane.xlu0 %268
        %270 = vadd.xlane.f32.xlu0 %v264
        %v271 = vpop.xlane.xlu0 %270
        %272 = vadd.xlane.f32.xlu0 %v265
        %v273 = vpop.xlane.xlu0 %272
        %v274 = vadd.f32 %v258, %v267
        %v275 = vadd.f32 %v259, %v269
        %v276 = vadd.f32 %v260, %v271
        %v277 = vadd.f32 %v261, %v273
        %278 = vst.msk [vmem:[%s3] sm:$0xff] %vm253, %v274
        %279 = vst.msk [vmem:[%s3 + $0x8] sm:$0xff] %vm253, %v275
        %280 = vst.msk [vmem:[%s3 + $0x10] sm:$0xff] %vm253, %v276
        %281 = vst.msk [vmem:[%s3 + $0x18] sm:$0xff] %vm253, %v277
        // Predicated region
        $region37: #{tpu_custom_call.1} parent=27 // pred_check
          %p282 = pneg %p78
        $region38: #{tpu_custom_call.1} parent=27 // pred_check_branch
          %284 = sbr.rel (%p282) target = $region40
        $region39: #{tpu_custom_call.1} parent=27 // pred_region
          _
        $region40: #{tpu_custom_call.1} parent=27 // pred_fallthru
          _
        // Predicated region
        $region41: #{tpu_custom_call.1} parent=27 // pred_check
          %p285 = pneg %p99
        $region42: #{tpu_custom_call.1} parent=27 // pred_check_branch
          %287 = sbr.rel (%p285) target = $region44
        $region43: #{tpu_custom_call.1} parent=27 // pred_region
          _
        $region44: #{tpu_custom_call.1} parent=27 // pred_fallthru
          _
        // Predicated region
        $region45: #{tpu_custom_call.1} parent=27 // pred_check
          %p288 = pneg %p78
        $region46: #{tpu_custom_call.1} parent=27 // pred_check_branch
          %290 = sbr.rel (%p288) target = $region48
        $region47: #{tpu_custom_call.1} parent=27 // pred_region
          _
        $region48: #{tpu_custom_call.1} parent=27 // pred_fallthru
          _
        // Predicated region
        $region49: #{tpu_custom_call.1} parent=27 // pred_check
          %p291 = pneg %p99
        $region50: #{tpu_custom_call.1} parent=27 // pred_check_branch
          %293 = sbr.rel (%p291) target = $region52
        $region51: #{tpu_custom_call.1} parent=27 // pred_region
          _
        $region52: #{tpu_custom_call.1} parent=27 // pred_fallthru
          _
      $region28: #{tpu_custom_call.1} parent=5 // pred_fallthru
        _
      %p294 = scmp.le.s32.totalorder 2, %s13
      // Predicated region
      $region53: #{tpu_custom_call.1} parent=5 // pred_check
        %p295 = pneg %p294
      $region54: #{tpu_custom_call.1} parent=5 // pred_check_branch
        %297 = sbr.rel (%p295) target = $region56
      $region55: #{tpu_custom_call.1} parent=5 // pred_region
        %s298 = ssub.s32 %s13, 2
      $region56: #{tpu_custom_call.1} parent=5 // pred_fallthru
        _
    $region6: #{tpu_custom_call.1} parent=1 // loop_footer
      %s17 = sadd.s32 1, %s13
    $region7: #{tpu_custom_call.1} parent=1 // loop_footer_branch
      %12 = sbr.rel target = $region3
    $region8: #{tpu_custom_call.1} parent=1 // loop_exit
      _
    %299 = vsyncpa [#allocation3], 1
    %s300 = scalar_lea.sflag [#allocation3], 1
    %301 = vsyncpa %s300, 1

</llo_original>
